<compile_context>
chip_gen: v5e
topology: v5e:2x2
jax: 0.10.0
libtpu: 0.0.40
codegen_flags: <defaults>
</compile_context>

<pallas_src>
import functools

import jax
import jax.numpy as jnp
from jax import lax
from jax.experimental import pallas as pl
from jax.experimental.pallas import tpu as pltpu

_PAD = 128  # zero-pad width (flat pixels) on each side of the scratch; lane-aligned.


def _dwconv_kernel(x_ref, wdw_ref, b1_ref, wpw_ref, b2_ref, o_ref, pad_ref, *, width):
    # x_ref  : (1, Cin, H*W)       one image; channels on sublanes, flat pixels on lanes
    # wdw_ref: (9, Cin, H*W)       depthwise taps; BN1 scale + column-border mask folded in
    # b1_ref : (Cin, 1)            folded BN1 bias
    # wpw_ref: (Cout, Cin)         pointwise weights; BN2 scale folded in
    # b2_ref : (Cout, 1)           folded BN2 bias
    # o_ref  : (1, Cout, H*W)
    # pad_ref: (Cin, H*W + 2*PAD)  VMEM scratch; zero borders implement conv padding=1
    cin = x_ref.shape[1]
    hw = x_ref.shape[2]
    pad = (pad_ref.shape[1] - hw) // 2

    # Stage the image into the zero-padded flat-pixel scratch (128-lane-aligned stores).
    zeros = jnp.zeros((cin, pad), jnp.float32)
    pad_ref[:, 0:pad] = zeros
    pad_ref[:, pad + hw:pad + hw + pad] = zeros
    pad_ref[:, pad:pad + hw] = x_ref[0].astype(jnp.float32)

    # Depthwise 3x3: 9 shifted flat-pixel slices times the masked, BN-folded weight slab.
    acc = None
    for t in range(9):
        dy, dx = t // 3 - 1, t % 3 - 1
        shift = dy * width + dx
        xs = pad_ref[:, pad + shift:pad + shift + hw]          # (Cin, H*W)
        term = xs * wdw_ref[t]
        acc = term if acc is None else acc + term

    dwa = jnp.clip(acc + b1_ref[...], 0.0, 6.0)                # BN1 bias + ReLU6

    # Pointwise 1x1 as a single MXU matmul: (Cout, Cin) @ (Cin, H*W).
    y = jnp.dot(wpw_ref[...], dwa, preferred_element_type=jnp.float32)
    y = jnp.clip(y + b2_ref[...], 0.0, 6.0)                    # BN2 bias + ReLU6

    o_ref[0] = y.astype(o_ref.dtype)


def dwconv_pallas(x_nchw, w_dw, w_pw, bn1, bn2, eps=1e-5):
    """x_nchw: (B, Cin, H, W); w_dw: (Cin,1,3,3); w_pw: (Cout,Cin,1,1);
    bn1/bn2: dicts with gamma, beta, mean, var (per-channel, eval mode)."""
    B, Cin, H, W = x_nchw.shape
    Cout = w_pw.shape[0]
    HW = H * W
    assert W + 1 <= _PAD, "pad width must cover the maximum flat-pixel shift"

    # Fold eval-mode BatchNorm into per-channel scale (into the conv weights) + bias.
    s1 = bn1["gamma"] / jnp.sqrt(bn1["var"] + eps)
    b1 = bn1["beta"] - bn1["mean"] * s1
    s2 = bn2["gamma"] / jnp.sqrt(bn2["var"] + eps)
    b2 = bn2["beta"] - bn2["mean"] * s2

    # Depthwise weights -> (9, Cin, H*W) slab: BN1 scale folded in, and the left/right
    # column mask folded in so the flat-pixel shifts in the kernel never mix rows.
    wdw_scaled = w_dw[:, 0, :, :] * s1[:, None, None]          # (Cin, 3, 3)
    wcol = jnp.arange(W)
    taps = []
    for dy in (-1, 0, 1):
        for dx in (-1, 0, 1):
            valid = ((wcol + dx >= 0) & (wcol + dx < W)).astype(jnp.float32)   # (W,)
            mflat = jnp.tile(valid, (H,))                                       # (H*W,)
            taps.append(wdw_scaled[:, dy + 1, dx + 1][:, None] * mflat[None, :])
    wdw_slab = jnp.stack(taps, axis=0).astype(jnp.float32)      # (9, Cin, H*W)

    # Pointwise weights with BN2 scale folded in: (Cout, Cin).
    wpw_mat = (w_pw[:, :, 0, 0] * s2[:, None]).astype(jnp.float32)

    # Free reshape (trailing-dim merge, no data movement): flat pixels on the lane axis.
    x_flat = x_nchw.reshape(B, Cin, HW)

    kernel = functools.partial(_dwconv_kernel, width=W)

    out_flat = pl.pallas_call(
        kernel,
        out_shape=jax.ShapeDtypeStruct((B, Cout, HW), x_nchw.dtype),
        grid_spec=pltpu.PrefetchScalarGridSpec(
            num_scalar_prefetch=0,
            grid=(B,),
            in_specs=[
                pl.BlockSpec((1, Cin, HW), lambda n: (n, 0, 0)),
                pl.BlockSpec((9, Cin, HW), lambda n: (0, 0, 0)),
                pl.BlockSpec((Cin, 1), lambda n: (0, 0)),
                pl.BlockSpec((Cout, Cin), lambda n: (0, 0)),
                pl.BlockSpec((Cout, 1), lambda n: (0, 0)),
            ],
            out_specs=pl.BlockSpec((1, Cout, HW), lambda n: (n, 0, 0)),
            scratch_shapes=[pltpu.VMEM((Cin, HW + 2 * _PAD), jnp.float32)],
        ),
        compiler_params=pltpu.CompilerParams(
            dimension_semantics=("parallel",)),
    )(x_flat, wdw_slab,
      b1.reshape(Cin, 1).astype(jnp.float32),
      wpw_mat,
      b2.reshape(Cout, 1).astype(jnp.float32))

    # Free reshape back to NCHW.
    return out_flat.reshape(B, Cout, H, W)


def dwconv_reference(x_nchw, w_dw, w_pw, bn1, bn2, eps=1e-5):
    """Plain-JAX reference using lax.conv_general_dilated (NCHW)."""
    Cin = x_nchw.shape[1]
    y = lax.conv_general_dilated(
        x_nchw, w_dw, window_strides=(1, 1), padding=((1, 1), (1, 1)),
        dimension_numbers=("NCHW", "OIHW", "NCHW"), feature_group_count=Cin)
    s1 = bn1["gamma"] / jnp.sqrt(bn1["var"] + eps)
    b1 = bn1["beta"] - bn1["mean"] * s1
    y = y * s1[None, :, None, None] + b1[None, :, None, None]
    y = jnp.clip(y, 0.0, 6.0)
    y = lax.conv_general_dilated(
        y, w_pw, window_strides=(1, 1), padding=((0, 0), (0, 0)),
        dimension_numbers=("NCHW", "OIHW", "NCHW"))
    s2 = bn2["gamma"] / jnp.sqrt(bn2["var"] + eps)
    b2 = bn2["beta"] - bn2["mean"] * s2
    y = y * s2[None, :, None, None] + b2[None, :, None, None]
    return jnp.clip(y, 0.0, 6.0)


if __name__ == "__main__":
    # Module applies BatchNorm2d(in_channels) after the pointwise conv, so the forward
    # is only valid when out_channels == in_channels.
    B, C_IN, C_OUT, H, W = 2, 16, 16, 16, 16

    key = jax.random.PRNGKey(0)
    k = jax.random.split(key, 8)
    x = jax.random.normal(k[0], (B, C_IN, H, W), jnp.float32)
    w_dw = jax.random.normal(k[1], (C_IN, 1, 3, 3), jnp.float32) * 0.2
    w_pw = jax.random.normal(k[2], (C_OUT, C_IN, 1, 1), jnp.float32) * 0.2
    bn1 = dict(gamma=1.0 + 0.1 * jax.random.normal(k[3], (C_IN,), jnp.float32),
               beta=0.1 * jax.random.normal(k[4], (C_IN,), jnp.float32),
               mean=0.05 * jax.random.normal(k[5], (C_IN,), jnp.float32),
               var=jnp.abs(jax.random.normal(k[6], (C_IN,), jnp.float32)) + 0.5)
    bn2 = dict(gamma=1.0 + 0.1 * jax.random.normal(k[7], (C_OUT,), jnp.float32),
               beta=jnp.zeros((C_OUT,), jnp.float32),
               mean=jnp.zeros((C_OUT,), jnp.float32),
               var=jnp.ones((C_OUT,), jnp.float32))

    out = dwconv_pallas(x, w_dw, w_pw, bn1, bn2)
    out = jax.block_until_ready(out)

    ref = dwconv_reference(x, w_dw, w_pw, bn1, bn2)
    assert out.shape == (B, C_OUT, H, W)
    assert jnp.allclose(out, ref, atol=2e-4, rtol=2e-4)

    print("KERNEL_OK")
</pallas_src>

<mosaic_0001>
module attributes {stable_mosaic.version = 11 : i64} {
  func.func @_dwconv_kernel(%arg0: i32, %arg1: memref<1x16x256xf32, #tpu.memory_space<vmem>>, %arg2: memref<9x16x256xf32, #tpu.memory_space<vmem>>, %arg3: memref<16x1xf32, #tpu.memory_space<vmem>>, %arg4: memref<16x16xf32, #tpu.memory_space<vmem>>, %arg5: memref<16x1xf32, #tpu.memory_space<vmem>>, %arg6: memref<1x16x256xf32, #tpu.memory_space<vmem>>, %arg7: memref<16x512xf32, #tpu.memory_space<vmem>>) attributes {dimension_semantics = [#tpu.dimension_semantics<parallel>], iteration_bounds = array<i64: 2>, scalar_prefetch = 0 : i64, scratch_operands = 1 : i64, tpu.core_type = #tpu.core_type<tc>, window_params = [{transform_indices = @transform_0, window_bounds = array<i64: 1, 16, 256>}, {pipeline_mode = #tpu.pipeline_mode<synchronous>, transform_indices = @transform_1, window_bounds = array<i64: 9, 16, 256>}, {pipeline_mode = #tpu.pipeline_mode<synchronous>, transform_indices = @transform_2, window_bounds = array<i64: 16, 1>}, {pipeline_mode = #tpu.pipeline_mode<synchronous>, transform_indices = @transform_3, window_bounds = array<i64: 16, 16>}, {pipeline_mode = #tpu.pipeline_mode<synchronous>, transform_indices = @transform_4, window_bounds = array<i64: 16, 1>}, {transform_indices = @transform_5, window_bounds = array<i64: 1, 16, 256>}]} {
    %cst = arith.constant 0.000000e+00 : f32
    %0 = vector.broadcast %cst : f32 to vector<16x128xf32>
    %c0 = arith.constant 0 : index
    %c0_0 = arith.constant 0 : index
    %1 = vector.load %arg7[%c0, %c0_0] : memref<16x512xf32, #tpu.memory_space<vmem>>, vector<16x128xf32>
    tpu.vector_store %arg7[%c0, %c0_0], %0 {strides = array<i32>} : memref<16x512xf32, #tpu.memory_space<vmem>>, vector<16x128xf32>,
    %c0_1 = arith.constant 0 : index
    %c384 = arith.constant 384 : index
    %2 = vector.load %arg7[%c0_1, %c384] : memref<16x512xf32, #tpu.memory_space<vmem>>, vector<16x128xf32>
    tpu.vector_store %arg7[%c0_1, %c384], %0 {strides = array<i32>} : memref<16x512xf32, #tpu.memory_space<vmem>>, vector<16x128xf32>,
    %c0_2 = arith.constant 0 : index
    %c0_3 = arith.constant 0 : index
    %c0_4 = arith.constant 0 : index
    %3 = vector.load %arg1[%c0_2, %c0_3, %c0_4] : memref<1x16x256xf32, #tpu.memory_space<vmem>>, vector<1x16x256xf32>
    %4 = vector.shape_cast %3 : vector<1x16x256xf32> to vector<16x256xf32>
    %c0_5 = arith.constant 0 : index
    %c128 = arith.constant 128 : index
    %5 = vector.load %arg7[%c0_5, %c128] : memref<16x512xf32, #tpu.memory_space<vmem>>, vector<16x256xf32>
    tpu.vector_store %arg7[%c0_5, %c128], %4 {strides = array<i32>} : memref<16x512xf32, #tpu.memory_space<vmem>>, vector<16x256xf32>,
    %c0_6 = arith.constant 0 : index
    %c111 = arith.constant 111 : index
    %6 = vector.load %arg7[%c0_6, %c111] : memref<16x512xf32, #tpu.memory_space<vmem>>, vector<16x256xf32>
    %c0_7 = arith.constant 0 : index
    %c0_8 = arith.constant 0 : index
    %c0_9 = arith.constant 0 : index
    %7 = vector.load %arg2[%c0_7, %c0_8, %c0_9] : memref<9x16x256xf32, #tpu.memory_space<vmem>>, vector<1x16x256xf32>
    %8 = vector.shape_cast %7 : vector<1x16x256xf32> to vector<16x256xf32>
    %9 = arith.mulf %6, %8 : vector<16x256xf32>
    %c0_10 = arith.constant 0 : index
    %c112 = arith.constant 112 : index
    %10 = vector.load %arg7[%c0_10, %c112] : memref<16x512xf32, #tpu.memory_space<vmem>>, vector<16x256xf32>
    %c1 = arith.constant 1 : index
    %c0_11 = arith.constant 0 : index
    %c0_12 = arith.constant 0 : index
    %11 = vector.load %arg2[%c1, %c0_11, %c0_12] : memref<9x16x256xf32, #tpu.memory_space<vmem>>, vector<1x16x256xf32>
    %12 = vector.shape_cast %11 : vector<1x16x256xf32> to vector<16x256xf32>
    %13 = arith.mulf %10, %12 : vector<16x256xf32>
    %14 = arith.addf %9, %13 : vector<16x256xf32>
    %c0_13 = arith.constant 0 : index
    %c113 = arith.constant 113 : index
    %15 = vector.load %arg7[%c0_13, %c113] : memref<16x512xf32, #tpu.memory_space<vmem>>, vector<16x256xf32>
    %c2 = arith.constant 2 : index
    %c0_14 = arith.constant 0 : index
    %c0_15 = arith.constant 0 : index
    %16 = vector.load %arg2[%c2, %c0_14, %c0_15] : memref<9x16x256xf32, #tpu.memory_space<vmem>>, vector<1x16x256xf32>
    %17 = vector.shape_cast %16 : vector<1x16x256xf32> to vector<16x256xf32>
    %18 = arith.mulf %15, %17 : vector<16x256xf32>
    %19 = arith.addf %14, %18 : vector<16x256xf32>
    %c0_16 = arith.constant 0 : index
    %c127 = arith.constant 127 : index
    %20 = vector.load %arg7[%c0_16, %c127] : memref<16x512xf32, #tpu.memory_space<vmem>>, vector<16x256xf32>
    %c3 = arith.constant 3 : index
    %c0_17 = arith.constant 0 : index
    %c0_18 = arith.constant 0 : index
    %21 = vector.load %arg2[%c3, %c0_17, %c0_18] : memref<9x16x256xf32, #tpu.memory_space<vmem>>, vector<1x16x256xf32>
    %22 = vector.shape_cast %21 : vector<1x16x256xf32> to vector<16x256xf32>
    %23 = arith.mulf %20, %22 : vector<16x256xf32>
    %24 = arith.addf %19, %23 : vector<16x256xf32>
    %c0_19 = arith.constant 0 : index
    %c128_20 = arith.constant 128 : index
    %25 = vector.load %arg7[%c0_19, %c128_20] : memref<16x512xf32, #tpu.memory_space<vmem>>, vector<16x256xf32>
    %c4 = arith.constant 4 : index
    %c0_21 = arith.constant 0 : index
    %c0_22 = arith.constant 0 : index
    %26 = vector.load %arg2[%c4, %c0_21, %c0_22] : memref<9x16x256xf32, #tpu.memory_space<vmem>>, vector<1x16x256xf32>
    %27 = vector.shape_cast %26 : vector<1x16x256xf32> to vector<16x256xf32>
    %28 = arith.mulf %25, %27 : vector<16x256xf32>
    %29 = arith.addf %24, %28 : vector<16x256xf32>
    %c0_23 = arith.constant 0 : index
    %c129 = arith.constant 129 : index
    %30 = vector.load %arg7[%c0_23, %c129] : memref<16x512xf32, #tpu.memory_space<vmem>>, vector<16x256xf32>
    %c5 = arith.constant 5 : index
    %c0_24 = arith.constant 0 : index
    %c0_25 = arith.constant 0 : index
    %31 = vector.load %arg2[%c5, %c0_24, %c0_25] : memref<9x16x256xf32, #tpu.memory_space<vmem>>, vector<1x16x256xf32>
    %32 = vector.shape_cast %31 : vector<1x16x256xf32> to vector<16x256xf32>
    %33 = arith.mulf %30, %32 : vector<16x256xf32>
    %34 = arith.addf %29, %33 : vector<16x256xf32>
    %c0_26 = arith.constant 0 : index
    %c143 = arith.constant 143 : index
    %35 = vector.load %arg7[%c0_26, %c143] : memref<16x512xf32, #tpu.memory_space<vmem>>, vector<16x256xf32>
    %c6 = arith.constant 6 : index
    %c0_27 = arith.constant 0 : index
    %c0_28 = arith.constant 0 : index
    %36 = vector.load %arg2[%c6, %c0_27, %c0_28] : memref<9x16x256xf32, #tpu.memory_space<vmem>>, vector<1x16x256xf32>
    %37 = vector.shape_cast %36 : vector<1x16x256xf32> to vector<16x256xf32>
    %38 = arith.mulf %35, %37 : vector<16x256xf32>
    %39 = arith.addf %34, %38 : vector<16x256xf32>
    %c0_29 = arith.constant 0 : index
    %c144 = arith.constant 144 : index
    %40 = vector.load %arg7[%c0_29, %c144] : memref<16x512xf32, #tpu.memory_space<vmem>>, vector<16x256xf32>
    %c7 = arith.constant 7 : index
    %c0_30 = arith.constant 0 : index
    %c0_31 = arith.constant 0 : index
    %41 = vector.load %arg2[%c7, %c0_30, %c0_31] : memref<9x16x256xf32, #tpu.memory_space<vmem>>, vector<1x16x256xf32>
    %42 = vector.shape_cast %41 : vector<1x16x256xf32> to vector<16x256xf32>
    %43 = arith.mulf %40, %42 : vector<16x256xf32>
    %44 = arith.addf %39, %43 : vector<16x256xf32>
    %c0_32 = arith.constant 0 : index
    %c145 = arith.constant 145 : index
    %45 = vector.load %arg7[%c0_32, %c145] : memref<16x512xf32, #tpu.memory_space<vmem>>, vector<16x256xf32>
    %c8 = arith.constant 8 : index
    %c0_33 = arith.constant 0 : index
    %c0_34 = arith.constant 0 : index
    %46 = vector.load %arg2[%c8, %c0_33, %c0_34] : memref<9x16x256xf32, #tpu.memory_space<vmem>>, vector<1x16x256xf32>
    %47 = vector.shape_cast %46 : vector<1x16x256xf32> to vector<16x256xf32>
    %48 = arith.mulf %45, %47 : vector<16x256xf32>
    %49 = arith.addf %44, %48 : vector<16x256xf32>
    %c0_35 = arith.constant 0 : index
    %c0_36 = arith.constant 0 : index
    %50 = vector.load %arg3[%c0_35, %c0_36] : memref<16x1xf32, #tpu.memory_space<vmem>>, vector<16x1xf32>
    %51 = vector.broadcast %50 : vector<16x1xf32> to vector<16x256xf32>
    %52 = arith.addf %49, %51 : vector<16x256xf32>
    %cst_37 = arith.constant 0.000000e+00 : f32
    %cst_38 = arith.constant 6.000000e+00 : f32
    %53 = vector.broadcast %cst_37 : f32 to vector<16x256xf32>
    %54 = arith.maximumf %53, %52 : vector<16x256xf32>
    %55 = vector.broadcast %cst_38 : f32 to vector<16x256xf32>
    %56 = arith.minimumf %55, %54 : vector<16x256xf32>
    %c0_39 = arith.constant 0 : index
    %c0_40 = arith.constant 0 : index
    %57 = vector.load %arg4[%c0_39, %c0_40] : memref<16x16xf32, #tpu.memory_space<vmem>>, vector<16x16xf32>
    %cst_41 = arith.constant dense<0.000000e+00> : vector<16x256xf32>
    %58 = tpu.matmul %57, %56, %cst_41 {dimension_numbers = #tpu.dot_dimension_numbers<[1], [0], [0], [1], [0, 0, 1, 1], [], []>} : vector<16x16xf32>, vector<16x256xf32>, vector<16x256xf32> -> vector<16x256xf32>
    %c0_42 = arith.constant 0 : index
    %c0_43 = arith.constant 0 : index
    %59 = vector.load %arg5[%c0_42, %c0_43] : memref<16x1xf32, #tpu.memory_space<vmem>>, vector<16x1xf32>
    %60 = vector.broadcast %59 : vector<16x1xf32> to vector<16x256xf32>
    %61 = arith.addf %58, %60 : vector<16x256xf32>
    %cst_44 = arith.constant 0.000000e+00 : f32
    %cst_45 = arith.constant 6.000000e+00 : f32
    %62 = vector.broadcast %cst_44 : f32 to vector<16x256xf32>
    %63 = arith.maximumf %62, %61 : vector<16x256xf32>
    %64 = vector.broadcast %cst_45 : f32 to vector<16x256xf32>
    %65 = arith.minimumf %64, %63 : vector<16x256xf32>
    %c0_46 = arith.constant 0 : index
    %c0_47 = arith.constant 0 : index
    %c0_48 = arith.constant 0 : index
    %66 = vector.load %arg6[%c0_46, %c0_47, %c0_48] : memref<1x16x256xf32, #tpu.memory_space<vmem>>, vector<1x16x256xf32>
    %67 = vector.shape_cast %66 : vector<1x16x256xf32> to vector<16x256xf32>
    %68 = vector.shape_cast %65 : vector<16x256xf32> to vector<1x16x256xf32>
    tpu.vector_store %arg6[%c0_46, %c0_47, %c0_48], %68 {strides = array<i32>} : memref<1x16x256xf32, #tpu.memory_space<vmem>>, vector<1x16x256xf32>,
    return
  }
  func.func @transform_0(%arg0: i32) -> (i32, i32, i32) {
    %c0_i32 = arith.constant 0 : i32
    %c0_i32_0 = arith.constant 0 : i32
    %c0_i32_1 = arith.constant 0 : i32
    return %arg0, %c0_i32, %c0_i32_0 : i32, i32, i32
  }
  func.func @transform_1(%arg0: i32) -> (i32, i32, i32) {
    %c0_i32 = arith.constant 0 : i32
    %c0_i32_0 = arith.constant 0 : i32
    %c0_i32_1 = arith.constant 0 : i32
    %c0_i32_2 = arith.constant 0 : i32
    return %c0_i32, %c0_i32_0, %c0_i32_1 : i32, i32, i32
  }
  func.func @transform_2(%arg0: i32) -> (i32, i32) {
    %c0_i32 = arith.constant 0 : i32
    %c0_i32_0 = arith.constant 0 : i32
    %c0_i32_1 = arith.constant 0 : i32
    return %c0_i32, %c0_i32_0 : i32, i32
  }
  func.func @transform_3(%arg0: i32) -> (i32, i32) {
    %c0_i32 = arith.constant 0 : i32
    %c0_i32_0 = arith.constant 0 : i32
    %c0_i32_1 = arith.constant 0 : i32
    return %c0_i32, %c0_i32_0 : i32, i32
  }
  func.func @transform_4(%arg0: i32) -> (i32, i32) {
    %c0_i32 = arith.constant 0 : i32
    %c0_i32_0 = arith.constant 0 : i32
    %c0_i32_1 = arith.constant 0 : i32
    return %c0_i32, %c0_i32_0 : i32, i32
  }
  func.func @transform_5(%arg0: i32) -> (i32, i32, i32) {
    %c0_i32 = arith.constant 0 : i32
    %c0_i32_0 = arith.constant 0 : i32
    %c0_i32_1 = arith.constant 0 : i32
    return %arg0, %c0_i32, %c0_i32_0 : i32, i32, i32
  }
}

</mosaic_0001>

<llo_original>
// kernel: tpu_custom_call.1
$region0: #{tpu_custom_call.1}
  #allocation0 [shape = 'u32[]', space=smem, size = 0x4, offset = 0x4, fixed_abs, tag = 'smem constant byte address 0x4 - core index']
  #allocation1 [shape = 'u32[72,128]{1,0:T(1,128)}', space=vmem, size = 0x9000, scoped, tag = 'internal scratch']
  #allocation2 [shape = 'f32[16,512]{1,0:T(8,128)}', space=vmem, size = 0x8000, scoped, tag = 'scratch operand']
  %s0 = inlined_call_operand.hbm [shape: f32[2,16,256], index: 0, kind: input, shape index: {}]
  %s1 = inlined_call_operand.hbm [shape: f32[9,16,256], index: 1, kind: input, shape index: {}]
  %s2 = inlined_call_operand.vmem [shape: f32[16,1], index: 2, kind: input, shape index: {}]
  %s3 = inlined_call_operand.vmem [shape: f32[16,16], index: 3, kind: input, shape index: {}]
  %s4 = inlined_call_operand.vmem [shape: f32[16,1], index: 4, kind: input, shape index: {}]
  %s5 = inlined_call_operand.hbm [shape: f32[2,16,256], index: 5, kind: output, shape index: {}]
  %s6 = sld [smem:[#allocation0]]
  $region61: #{tpu_custom_call.1} parent=0
    _
  %s8 = ssub.s32 1, %s6
  %s9 = scalar_select 0, %s8, %s6
  $region1: #{tpu_custom_call.1} parent=0
    #allocation3 [shape = 'u8[32768]{0}', space=vmem, size = 0x8000, scoped, tag = 'input window, operand 0']
    #allocation4 [shape = 's32[2]{0}', space=sflag, size = 0x8, scoped, tag = 'scoped memory for tpu_custom_call.1']
    #allocation5 [shape = 's32[2]{0}', space=sflag, size = 0x8, scoped, tag = 'scoped memory for tpu_custom_call.1']
    #allocation6 [shape = 'u8[147456]{0}', space=vmem, size = 0x24000, scoped, tag = 'input window, operand 1, single buffered']
    #allocation7 [shape = 's32[1]{0}', space=sflag, size = 0x4, scoped, tag = 'scoped memory for tpu_custom_call.1']
    #allocation8 [shape = 'u8[32768]{0}', space=vmem, size = 0x8000, scoped, tag = 'output window, operand 0']
    %10 = vsyncpa [#allocation4], 0
    %s11 = scalar_lea.sflag [#allocation4], 1
    %12 = vsyncpa %s11, 0
    %13 = vsyncpa [#allocation7], 0
    %14 = vsyncpa [#allocation5], 0
    %s15 = scalar_lea.sflag [#allocation5], 1
    %16 = vsyncpa %s15, 0
    loop: start=0, step=1, limit=4
    $region2: #{tpu_custom_call.1} parent=1 // loop_pre_header
      _
    $region3: #{tpu_custom_call.1} parent=1 // loop_header
      %s18 = sphi 0, %s22
      %p19 = scmp.ge.s32.totalorder %s18, 4
      %s28 = sphi 0, %s30
      %s31 = sphi 0, %s28
      %s32 = sphi 0, %s31
      %s48 = sphi 0, %s32
      %s52 = sphi 0, %s52
      %s54 = sphi 0, %s52
      %s55 = sphi 0, %s54
      %s69 = sphi 0, %s55
      %s73 = sphi 0, %s73
      %s75 = sphi 0, %s73
      %s76 = sphi 0, %s75
      %s90 = sphi 0, %s76
      %s94 = sphi 0, %s94
      %s96 = sphi 0, %s94
      %s97 = sphi 0, %s96
      %s111 = sphi 0, %s97
      %s115 = sphi 0, %s115
      %s117 = sphi 0, %s115
      %s118 = sphi 0, %s117
      %s132 = sphi 0, %s118
      %s138 = sphi 0, %s140
      %s141 = sphi 0, %s138
      %s142 = sphi 0, %s141
      %s158 = sphi 0, %s142
    $region4: #{tpu_custom_call.1} parent=1 // loop_header_branch
      %21 = sbr.rel (%p19) target = $region8
    $region5: #{tpu_custom_call.1} parent=1 // loop_body
      %s23 = ssub.s32 %s18, 1
      %s24 = ssub.s32 %s18, 2
      %s25 = sadd.s32 %s18, 1
      %s26 = ssub.s32 %s18, %s25
      %p27 = scmp.eq.s32.totalorder %s26, 0
      %s29 = sadd.s32 %s28, 1
      %s30 = scalar_select %p27, %s28, %s29
      %p33 = pneg %p27
      %p34 = scmp.eq.s32.totalorder %s18, 1
      %p35 = por %p33, %p34
      %p36 = scmp.ne.s32.totalorder %s28, %s31
      %p37 = scmp.eq.s32.totalorder %s18, 0
      %p38 = por %p36, %p37
      %p39 = scmp.ne.s32.totalorder %s28, %s31
      %p40 = scmp.eq.s32.totalorder %s23, 1
      %p41 = por %p39, %p40
      %p42 = scmp.ne.s32.totalorder %s31, %s32
      %p43 = scmp.eq.s32.totalorder %s23, 0
      %p44 = por %p42, %p43
      %p45 = scmp.ne.s32.totalorder %s31, %s32
      %p46 = scmp.eq.s32.totalorder %s24, 1
      %p47 = por %p45, %p46
      %p49 = scmp.ne.s32.totalorder %s32, %s48
      %p50 = scmp.eq.s32.totalorder %s24, 0
      %p51 = por %p49, %p50
      %s53 = sadd.s32 %s52, 1
      %p56 = scmp.eq.s32.totalorder %s18, 1
      %p57 = scmp.ne.s32.totalorder %s52, %s54
      %p58 = scmp.eq.s32.totalorder %s18, 0
      %p59 = por %p57, %p58
      %p60 = scmp.ne.s32.totalorder %s52, %s54
      %p61 = scmp.eq.s32.totalorder %s23, 1
      %p62 = por %p60, %p61
      %p63 = scmp.ne.s32.totalorder %s54, %s55
      %p64 = scmp.eq.s32.totalorder %s23, 0
      %p65 = por %p63, %p64
      %p66 = scmp.ne.s32.totalorder %s54, %s55
      %p67 = scmp.eq.s32.totalorder %s24, 1
      %p68 = por %p66, %p67
      %p70 = scmp.ne.s32.totalorder %s55, %s69
      %p71 = scmp.eq.s32.totalorder %s24, 0
      %p72 = por %p70, %p71
      %s74 = sadd.s32 %s73, 1
      %p77 = scmp.eq.s32.totalorder %s18, 1
      %p78 = scmp.ne.s32.totalorder %s73, %s75
      %p79 = scmp.eq.s32.totalorder %s18, 0
      %p80 = por %p78, %p79
      %p81 = scmp.ne.s32.totalorder %s73, %s75
      %p82 = scmp.eq.s32.totalorder %s23, 1
      %p83 = por %p81, %p82
      %p84 = scmp.ne.s32.totalorder %s75, %s76
      %p85 = scmp.eq.s32.totalorder %s23, 0
      %p86 = por %p84, %p85
      %p87 = scmp.ne.s32.totalorder %s75, %s76
      %p88 = scmp.eq.s32.totalorder %s24, 1
      %p89 = por %p87, %p88
      %p91 = scmp.ne.s32.totalorder %s76, %s90
      %p92 = scmp.eq.s32.totalorder %s24, 0
      %p93 = por %p91, %p92
      %s95 = sadd.s32 %s94, 1
      %p98 = scmp.eq.s32.totalorder %s18, 1
      %p99 = scmp.ne.s32.totalorder %s94, %s96
      %p100 = scmp.eq.s32.totalorder %s18, 0
      %p101 = por %p99, %p100
      %p102 = scmp.ne.s32.totalorder %s94, %s96
      %p103 = scmp.eq.s32.totalorder %s23, 1
      %p104 = por %p102, %p103
      %p105 = scmp.ne.s32.totalorder %s96, %s97
      %p106 = scmp.eq.s32.totalorder %s23, 0
      %p107 = por %p105, %p106
      %p108 = scmp.ne.s32.totalorder %s96, %s97
      %p109 = scmp.eq.s32.totalorder %s24, 1
      %p110 = por %p108, %p109
      %p112 = scmp.ne.s32.totalorder %s97, %s111
      %p113 = scmp.eq.s32.totalorder %s24, 0
      %p114 = por %p112, %p113
      %s116 = sadd.s32 %s115, 1
      %p119 = scmp.eq.s32.totalorder %s18, 1
      %p120 = scmp.ne.s32.totalorder %s115, %s117
      %p121 = scmp.eq.s32.totalorder %s18, 0
      %p122 = por %p120, %p121
      %p123 = scmp.ne.s32.totalorder %s115, %s117
      %p124 = scmp.eq.s32.totalorder %s23, 1
      %p125 = por %p123, %p124
      %p126 = scmp.ne.s32.totalorder %s117, %s118
      %p127 = scmp.eq.s32.totalorder %s23, 0
      %p128 = por %p126, %p127
      %p129 = scmp.ne.s32.totalorder %s117, %s118
      %p130 = scmp.eq.s32.totalorder %s24, 1
      %p131 = por %p129, %p130
      %p133 = scmp.ne.s32.totalorder %s118, %s132
      %p134 = scmp.eq.s32.totalorder %s24, 0
      %p135 = por %p133, %p134
      %s136 = ssub.s32 %s18, %s25
      %p137 = scmp.eq.s32.totalorder %s136, 0
      %s139 = sadd.s32 %s138, 1
      %s140 = scalar_select %p137, %s138, %s139
      %p143 = pneg %p137
      %p144 = scmp.eq.s32.totalorder %s18, 1
      %p145 = por %p143, %p144
      %p146 = scmp.ne.s32.totalorder %s138, %s141
      %p147 = scmp.eq.s32.totalorder %s18, 0
      %p148 = por %p146, %p147
      %p149 = scmp.ne.s32.totalorder %s138, %s141
      %p150 = scmp.eq.s32.totalorder %s23, 1
      %p151 = por %p149, %p150
      %p152 = scmp.ne.s32.totalorder %s141, %s142
      %p153 = scmp.eq.s32.totalorder %s23, 0
      %p154 = por %p152, %p153
      %p155 = scmp.ne.s32.totalorder %s141, %s142
      %p156 = scmp.eq.s32.totalorder %s24, 1
      %p157 = por %p155, %p156
      %p159 = scmp.ne.s32.totalorder %s142, %s158
      %p160 = scmp.eq.s32.totalorder %s24, 0
      %p161 = por %p159, %p160
      %p162 = scmp.le.s32.totalorder 1, %s18
      %p163 = scmp.lt.s32.totalorder %s18, 3
      %p164 = pnand %p162, %p163
      %p165 = pneg %p164
      // Predicated region
      $region9: #{tpu_custom_call.1} parent=5 // pred_check
        _
      $region10: #{tpu_custom_call.1} parent=5 // pred_check_branch
        %167 = sbr.rel (%p164) target = $region12
      $region11: #{tpu_custom_call.1} parent=5 // pred_region
        %s168 = ssub.s32 %s18, 1
        // Predicated region
        $region13: #{tpu_custom_call.1} parent=11 // pred_check
          %p169 = pneg %p65
        $region14: #{tpu_custom_call.1} parent=11 // pred_check_branch
          %171 = sbr.rel (%p169) target = $region16
        $region15: #{tpu_custom_call.1} parent=11 // pred_region
          %173 = vsyncadd [#allocation7], 0
          %s174 = sshll.u32 %s1, 4
          %s175 = int_to_ptr.hbm [resolvable:$true] %s174
          %s176 = sshll.u32 [#allocation6], 4
          %s177 = int_to_ptr.vmem [resolvable:$true] %s176
          %182 = dma.hbm_to_vmem [thread:$0]  %s175, 4608, %s177, [#allocation7], 256, 256, 16
        $region16: #{tpu_custom_call.1} parent=11 // pred_fallthru
          _
        // Predicated region
        $region17: #{tpu_custom_call.1} parent=11 // pred_check
          %p183 = pneg %p86
        $region18: #{tpu_custom_call.1} parent=11 // pred_check_branch
          %185 = sbr.rel (%p183) target = $region20
        $region19: #{tpu_custom_call.1} parent=11 // pred_region
          _
        $region20: #{tpu_custom_call.1} parent=11 // pred_fallthru
          _
        // Predicated region
        $region21: #{tpu_custom_call.1} parent=11 // pred_check
          %p186 = pneg %p107
        $region22: #{tpu_custom_call.1} parent=11 // pred_check_branch
          %188 = sbr.rel (%p186) target = $region24
        $region23: #{tpu_custom_call.1} parent=11 // pred_region
          _
        $region24: #{tpu_custom_call.1} parent=11 // pred_fallthru
          _
        // Predicated region
        $region25: #{tpu_custom_call.1} parent=11 // pred_check
          %p189 = pneg %p128
        $region26: #{tpu_custom_call.1} parent=11 // pred_check_branch
          %191 = sbr.rel (%p189) target = $region28
        $region27: #{tpu_custom_call.1} parent=11 // pred_region
          _
        $region28: #{tpu_custom_call.1} parent=11 // pred_fallthru
          _
      $region12: #{tpu_custom_call.1} parent=5 // pred_fallthru
        _
      %p192 = scmp.lt.s32.totalorder %s18, 2
      // Predicated region
      $region29: #{tpu_custom_call.1} parent=5 // pred_check
        %p193 = pneg %p192
      $region30: #{tpu_custom_call.1} parent=5 // pred_check_branch
        %195 = sbr.rel (%p193) target = $region32
      $region31: #{tpu_custom_call.1} parent=5 // pred_region
        // Predicated region
        $region33: #{tpu_custom_call.1} parent=31 // pred_check
          %p196 = pneg %p38
        $region34: #{tpu_custom_call.1} parent=31 // pred_check_branch
          %198 = sbr.rel (%p196) target = $region36
        $region35: #{tpu_custom_call.1} parent=31 // pred_region
          %s199 = sand.u32 %s28, 1
          %s200 = scalar_lea.sflag [#allocation4], %s199
          %s201 = sand.u32 %s28, 1
          %s202 = smul.addr %s201, 32
          %s203 = scalar_lea.vmem [#allocation3], %s202
          %205 = vsyncadd %s200, 0
          %s206 = smul.addr %s18, 4
          %s207 = smul.addr %s206, 8
          %s208 = scalar_lea.hbm %s0, %s207
          %s209 = sshll.u32 %s208, 4
          %s210 = int_to_ptr.hbm [resolvable:$true] %s209
          %s211 = sshll.u32 %s203, 4
          %s212 = int_to_ptr.vmem [resolvable:$true] %s211
          %217 = dma.hbm_to_vmem [thread:$0]  %s210, 512, %s212, %s200, 256, 256, 16
        $region36: #{tpu_custom_call.1} parent=31 // pred_fallthru
          _
      $region32: #{tpu_custom_call.1} parent=5 // pred_fallthru
        _
      %p218 = scmp.le.s32.totalorder 1, %s18
      %p219 = scmp.lt.s32.totalorder %s18, 3
      %p220 = pnand %p218, %p219
      %p221 = pneg %p220
      // Predicated region
      $region37: #{tpu_custom_call.1} parent=5 // pred_check
        _
      $region38: #{tpu_custom_call.1} parent=5 // pred_check_branch
        %223 = sbr.rel (%p220) target = $region40
      $region39: #{tpu_custom_call.1} parent=5 // pred_region
        %s224 = ssub.s32 %s18, 1
        %s225 = sand.u32 %s31, 1
        %s226 = scalar_lea.sflag [#allocation4], %s225
        %s227 = sand.u32 %s31, 1
        %s228 = smul.addr %s227, 32
        %s229 = scalar_lea.vmem [#allocation3], %s228
        // Predicated region
        $region41: #{tpu_custom_call.1} parent=39 // pred_check
          %p230 = pneg %p44
        $region42: #{tpu_custom_call.1} parent=39 // pred_check_branch
          %232 = sbr.rel (%p230) target = $region44
        $region43: #{tpu_custom_call.1} parent=39 // pred_region
          %234 = dma.done %s226, 512
        $region44: #{tpu_custom_call.1} parent=39 // pred_fallthru
          _
        // Predicated region
        $region45: #{tpu_custom_call.1} parent=39 // pred_check
          %p235 = pneg %p65
        $region46: #{tpu_custom_call.1} parent=39 // pred_check_branch
          %237 = sbr.rel (%p235) target = $region48
        $region47: #{tpu_custom_call.1} parent=39 // pred_region
          %239 = dma.done [#allocation7], 4608
        $region48: #{tpu_custom_call.1} parent=39 // pred_fallthru
          _
        %s240 = sand.u32 %s31, 1
        %s241 = scalar_lea.sflag [#allocation4], %s240
        %s242 = sand.u32 %s31, 1
        %s243 = smul.addr %s242, 32
        %s244 = scalar_lea.vmem [#allocation3], %s243
        %p245 = pneg %p44
        %p246 = pneg %p41
        %p247 = pneg %p65
        %p248 = pneg %p62
        %p249 = pneg %p86
        %p250 = pneg %p83
        %p251 = pneg %p107
        %p252 = pneg %p104
        %p253 = pneg %p128
        %p254 = pneg %p125
        %p255 = pneg %p154
        %p256 = pneg %p151
        %s257 = sand.u32 %s141, 1
        %s258 = scalar_lea.sflag [#allocation5], %s257
        %s259 = sand.u32 %s141, 1
        %s260 = smul.addr %s259, 32
        %s261 = scalar_lea.vmem [#allocation8], %s260
        %262 = vst [vmem:[#allocation2] sm:$0xff] 0.0
        %263 = vst [vmem:[#allocation2 + $0x20] sm:$0xff] 0.0
        %264 = vst [vmem:[#allocation2 + $0x18] sm:$0xff] 0.0
        %265 = vst [vmem:[#allocation2 + $0x38] sm:$0xff] 0.0
        %v266 = vld [vmem:[%s229] sm:$0xff]
        %v267 = vld [vmem:[%s229 + $0x8] sm:$0xff]
        %v268 = vld [vmem:[%s229 + $0x10] sm:$0xff]
        %v269 = vld [vmem:[%s229 + $0x18] sm:$0xff]
        %270 = vst [vmem:[#allocation2 + $0x8] sm:$0xff] %v266
        %271 = vst [vmem:[#allocation2 + $0x10] sm:$0xff] %v267
        %272 = vst [vmem:[#allocation2 + $0x28] sm:$0xff] %v268
        %273 = vst [vmem:[#allocation2 + $0x30] sm:$0xff] %v269
        %v274 = vld [vmem:[#allocation2] sm:$0xff]
        %v275 = vld [vmem:[#allocation2 + $0x8] sm:$0xff]
        %v276 = vld [vmem:[#allocation2 + $0x10] sm:$0xff]
        %v277 = vld [vmem:[#allocation2 + $0x20] sm:$0xff]
        %v278 = vld [vmem:[#allocation2 + $0x28] sm:$0xff]
        %v279 = vld [vmem:[#allocation2 + $0x30] sm:$0xff]
        %v280 = vld [vmem:[#allocation6] sm:$0xff]
        %v281 = vld [vmem:[#allocation6 + $0x8] sm:$0xff]
        %v282 = vld [vmem:[#allocation6 + $0x10] sm:$0xff]
        %v283 = vld [vmem:[#allocation6 + $0x18] sm:$0xff]
        %288 = vrot.lane.b32.xlu0 %v280, 111
        %v289 = vpop.permute.xlu0 %288
        %290 = vrot.lane.b32.xlu0 %v281, 111
        %v291 = vpop.permute.xlu0 %290
        %292 = vrot.lane.b32.xlu0 %v282, 111
        %v293 = vpop.permute.xlu0 %292
        %294 = vrot.lane.b32.xlu0 %v283, 111
        %v295 = vpop.permute.xlu0 %294
        %vm296 = vcmask 908288
        %v297 = vsel %vm296, %v289, %v291
        %v298 = vsel %vm296, %v293, %v295
        %v305 = vmul.f32 %v274, %v289
        %v306 = vmul.f32 %v275, %v297
        %v307 = vmul.f32 %v276, %v291
        %v308 = vmul.f32 %v277, %v293
        %v309 = vmul.f32 %v278, %v298
        %v310 = vmul.f32 %v279, %v295
        %s311 = scalar_lea.vmem [#allocation6], 32
        %v312 = vld [vmem:[%s311] sm:$0xff]
        %v313 = vld [vmem:[%s311 + $0x8] sm:$0xff]
        %v314 = vld [vmem:[%s311 + $0x10] sm:$0xff]
        %v315 = vld [vmem:[%s311 + $0x18] sm:$0xff]
        %320 = vrot.lane.b32.xlu0 %v312, 112
        %v321 = vpop.permute.xlu0 %320
        %322 = vrot.lane.b32.xlu0 %v313, 112
        %v323 = vpop.permute.xlu0 %322
        %324 = vrot.lane.b32.xlu0 %v314, 112
        %v325 = vpop.permute.xlu0 %324
        %326 = vrot.lane.b32.xlu0 %v315, 112
        %v327 = vpop.permute.xlu0 %326
        %vm328 = vcmask 916480
        %v329 = vsel %vm328, %v321, %v323
        %v330 = vsel %vm328, %v325, %v327
        %v337 = vmul.f32 %v274, %v321
        %v338 = vmul.f32 %v275, %v329
        %v339 = vmul.f32 %v276, %v323
        %v340 = vmul.f32 %v277, %v325
        %v341 = vmul.f32 %v278, %v330
        %v342 = vmul.f32 %v279, %v327
        %349 = vrot.lane.b32.xlu0 %v337, 127
        %v350 = vpop.permute.xlu0 %349
        %351 = vrot.lane.b32.xlu0 %v338, 127
        %v352 = vpop.permute.xlu0 %351
        %353 = vrot.lane.b32.xlu0 %v339, 127
        %v354 = vpop.permute.xlu0 %353
        %355 = vrot.lane.b32.xlu0 %v340, 127
        %v356 = vpop.permute.xlu0 %355
        %357 = vrot.lane.b32.xlu0 %v341, 127
        %v358 = vpop.permute.xlu0 %357
        %359 = vrot.lane.b32.xlu0 %v342, 127
        %v360 = vpop.permute.xlu0 %359
        %vm361 = vcmask 1039360
        %v362 = vsel %vm361, %v350, %v352
        %v363 = vsel %vm361, %v352, %v354
        %v364 = vsel %vm361, %v356, %v358
        %v365 = vsel %vm361, %v358, %v360
        %v372 = vadd.f32 %v305, %v362
        %v373 = vadd.f32 %v306, %v363
        %v374 = vadd.f32 %v307, %v354
        %v375 = vadd.f32 %v308, %v364
        %v376 = vadd.f32 %v309, %v365
        %v377 = vadd.f32 %v310, %v360
        %s378 = scalar_lea.vmem [#allocation6], 64
        %v379 = vld [vmem:[%s378] sm:$0xff]
        %v380 = vld [vmem:[%s378 + $0x8] sm:$0xff]
        %v381 = vld [vmem:[%s378 + $0x10] sm:$0xff]
        %v382 = vld [vmem:[%s378 + $0x18] sm:$0xff]
        %387 = vrot.lane.b32.xlu0 %v379, 113
        %v388 = vpop.permute.xlu0 %387
        %389 = vrot.lane.b32.xlu0 %v380, 113
        %v390 = vpop.permute.xlu0 %389
        %391 = vrot.lane.b32.xlu0 %v381, 113
        %v392 = vpop.permute.xlu0 %391
        %393 = vrot.lane.b32.xlu0 %v382, 113
        %v394 = vpop.permute.xlu0 %393
        %vm395 = vcmask 924672
        %v396 = vsel %vm395, %v388, %v390
        %v397 = vsel %vm395, %v392, %v394
        %v404 = vmul.f32 %v274, %v388
        %v405 = vmul.f32 %v275, %v396
        %v406 = vmul.f32 %v276, %v390
        %v407 = vmul.f32 %v277, %v392
        %v408 = vmul.f32 %v278, %v397
        %v409 = vmul.f32 %v279, %v394
        %416 = vrot.lane.b32.xlu0 %v404, 126
        %v417 = vpop.permute.xlu0 %416
        %418 = vrot.lane.b32.xlu0 %v405, 126
        %v419 = vpop.permute.xlu0 %418
        %420 = vrot.lane.b32.xlu0 %v406, 126
        %v421 = vpop.permute.xlu0 %420
        %422 = vrot.lane.b32.xlu0 %v407, 126
        %v423 = vpop.permute.xlu0 %422
        %424 = vrot.lane.b32.xlu0 %v408, 126
        %v425 = vpop.permute.xlu0 %424
        %426 = vrot.lane.b32.xlu0 %v409, 126
        %v427 = vpop.permute.xlu0 %426
        %vm428 = vcmask 1031168
        %v429 = vsel %vm428, %v417, %v419
        %v430 = vsel %vm428, %v419, %v421
        %v431 = vsel %vm428, %v423, %v425
        %v432 = vsel %vm428, %v425, %v427
        %v439 = vadd.f32 %v372, %v429
        %v440 = vadd.f32 %v373, %v430
        %v441 = vadd.f32 %v374, %v421
        %v442 = vadd.f32 %v375, %v431
        %v443 = vadd.f32 %v376, %v432
        %v444 = vadd.f32 %v377, %v427
        %s445 = scalar_lea.vmem [#allocation6], 96
        %v446 = vld [vmem:[%s445] sm:$0xff]
        %v447 = vld [vmem:[%s445 + $0x8] sm:$0xff]
        %v448 = vld [vmem:[%s445 + $0x10] sm:$0xff]
        %v449 = vld [vmem:[%s445 + $0x18] sm:$0xff]
        %454 = vrot.lane.b32.xlu0 %v446, 127
        %v455 = vpop.permute.xlu0 %454
        %456 = vrot.lane.b32.xlu0 %v447, 127
        %v457 = vpop.permute.xlu0 %456
        %458 = vrot.lane.b32.xlu0 %v448, 127
        %v459 = vpop.permute.xlu0 %458
        %460 = vrot.lane.b32.xlu0 %v449, 127
        %v461 = vpop.permute.xlu0 %460
        %v462 = vsel %vm361, %v455, %v457
        %v463 = vsel %vm361, %v459, %v461
        %v470 = vmul.f32 %v274, %v455
        %v471 = vmul.f32 %v275, %v462
        %v472 = vmul.f32 %v276, %v457
        %v473 = vmul.f32 %v277, %v459
        %v474 = vmul.f32 %v278, %v463
        %v475 = vmul.f32 %v279, %v461
        %482 = vrot.lane.b32.xlu0 %v470, 112
        %v483 = vpop.permute.xlu0 %482
        %484 = vrot.lane.b32.xlu0 %v471, 112
        %v485 = vpop.permute.xlu0 %484
        %486 = vrot.lane.b32.xlu0 %v472, 112
        %v487 = vpop.permute.xlu0 %486
        %488 = vrot.lane.b32.xlu0 %v473, 112
        %v489 = vpop.permute.xlu0 %488
        %490 = vrot.lane.b32.xlu0 %v474, 112
        %v491 = vpop.permute.xlu0 %490
        %492 = vrot.lane.b32.xlu0 %v475, 112
        %v493 = vpop.permute.xlu0 %492
        %v494 = vsel %vm328, %v483, %v485
        %v495 = vsel %vm328, %v485, %v487
        %v496 = vsel %vm328, %v489, %v491
        %v497 = vsel %vm328, %v491, %v493
        %v504 = vadd.f32 %v439, %v494
        %v505 = vadd.f32 %v440, %v495
        %v506 = vadd.f32 %v441, %v487
        %v507 = vadd.f32 %v442, %v496
        %v508 = vadd.f32 %v443, %v497
        %v509 = vadd.f32 %v444, %v493
        %s510 = scalar_lea.vmem [#allocation6], 128
        %v511 = vld [vmem:[%s510] sm:$0xff]
        %v512 = vld [vmem:[%s510 + $0x8] sm:$0xff]
        %v513 = vld [vmem:[%s510 + $0x10] sm:$0xff]
        %v514 = vld [vmem:[%s510 + $0x18] sm:$0xff]
        %v515 = vmul.f32 %v275, %v511
        %v516 = vmul.f32 %v276, %v512
        %v517 = vmul.f32 %v278, %v513
        %v518 = vmul.f32 %v279, %v514
        %523 = vrot.lane.b32.xlu0 %v515, 111
        %v524 = vpop.permute.xlu0 %523
        %525 = vrot.lane.b32.xlu0 %v516, 111
        %v526 = vpop.permute.xlu0 %525
        %527 = vrot.lane.b32.xlu0 %v517, 111
        %v528 = vpop.permute.xlu0 %527
        %529 = vrot.lane.b32.xlu0 %v518, 111
        %v530 = vpop.permute.xlu0 %529
        %v531 = vsel %vm296, %v524, %v526
        %v532 = vsel %vm296, %v528, %v530
        %v539 = vadd.f32 %v504, %v524
        %v540 = vadd.f32 %v505, %v531
        %v541 = vadd.f32 %v506, %v526
        %v542 = vadd.f32 %v507, %v528
        %v543 = vadd.f32 %v508, %v532
        %v544 = vadd.f32 %v509, %v530
        %v545 = vld [vmem:[#allocation2 + $0x8] sm:$0xff]
        %v546 = vld [vmem:[#allocation2 + $0x10] sm:$0xff]
        %v547 = vld [vmem:[#allocation2 + $0x18] sm:$0xff]
        %v548 = vld [vmem:[#allocation2 + $0x28] sm:$0xff]
        %v549 = vld [vmem:[#allocation2 + $0x30] sm:$0xff]
        %v550 = vld [vmem:[#allocation2 + $0x38] sm:$0xff]
        %s551 = scalar_lea.vmem [#allocation6], 160
        %v552 = vld [vmem:[%s551] sm:$0xff]
        %v553 = vld [vmem:[%s551 + $0x8] sm:$0xff]
        %v554 = vld [vmem:[%s551 + $0x10] sm:$0xff]
        %v555 = vld [vmem:[%s551 + $0x18] sm:$0xff]
        %560 = vrot.lane.b32.xlu0 %v552, 1
        %v561 = vpop.permute.xlu0 %560
        %562 = vrot.lane.b32.xlu0 %v553, 1
        %v563 = vpop.permute.xlu0 %562
        %564 = vrot.lane.b32.xlu0 %v554, 1
        %v565 = vpop.permute.xlu0 %564
        %566 = vrot.lane.b32.xlu0 %v555, 1
        %v567 = vpop.permute.xlu0 %566
        %vm568 = vcmask 7168
        %v569 = vsel %vm568, %v561, %v563
        %v570 = vsel %vm568, %v565, %v567
        %v577 = vmul.f32 %v545, %v561
        %v578 = vmul.f32 %v546, %v569
        %v579 = vmul.f32 %v547, %v563
        %v580 = vmul.f32 %v548, %v565
        %v581 = vmul.f32 %v549, %v570
        %v582 = vmul.f32 %v550, %v567
        %589 = vrot.lane.b32.xlu0 %v577, 110
        %v590 = vpop.permute.xlu0 %589
        %591 = vrot.lane.b32.xlu0 %v578, 110
        %v592 = vpop.permute.xlu0 %591
        %593 = vrot.lane.b32.xlu0 %v579, 110
        %v594 = vpop.permute.xlu0 %593
        %595 = vrot.lane.b32.xlu0 %v580, 110
        %v596 = vpop.permute.xlu0 %595
        %597 = vrot.lane.b32.xlu0 %v581, 110
        %v598 = vpop.permute.xlu0 %597
        %599 = vrot.lane.b32.xlu0 %v582, 110
        %v600 = vpop.permute.xlu0 %599
        %vm601 = vcmask 900096
        %v602 = vsel %vm601, %v590, %v592
        %v603 = vsel %vm601, %v592, %v594
        %v604 = vsel %vm601, %v596, %v598
        %v605 = vsel %vm601, %v598, %v600
        %v612 = vadd.f32 %v539, %v590
        %v613 = vadd.f32 %v540, %v602
        %v614 = vadd.f32 %v541, %v603
        %v615 = vadd.f32 %v542, %v596
        %v616 = vadd.f32 %v543, %v604
        %v617 = vadd.f32 %v544, %v605
        %s618 = scalar_lea.vmem [#allocation6], 192
        %v619 = vld [vmem:[%s618] sm:$0xff]
        %v620 = vld [vmem:[%s618 + $0x8] sm:$0xff]
        %v621 = vld [vmem:[%s618 + $0x10] sm:$0xff]
        %v622 = vld [vmem:[%s618 + $0x18] sm:$0xff]
        %627 = vrot.lane.b32.xlu0 %v619, 15
        %v628 = vpop.permute.xlu0 %627
        %629 = vrot.lane.b32.xlu0 %v620, 15
        %v630 = vpop.permute.xlu0 %629
        %631 = vrot.lane.b32.xlu0 %v621, 15
        %v632 = vpop.permute.xlu0 %631
        %633 = vrot.lane.b32.xlu0 %v622, 15
        %v634 = vpop.permute.xlu0 %633
        %vm635 = vcmask 121856
        %v636 = vsel %vm635, %v628, %v630
        %v637 = vsel %vm635, %v632, %v634
        %v644 = vmul.f32 %v545, %v628
        %v645 = vmul.f32 %v546, %v636
        %v646 = vmul.f32 %v547, %v630
        %v647 = vmul.f32 %v548, %v632
        %v648 = vmul.f32 %v549, %v637
        %v649 = vmul.f32 %v550, %v634
        %656 = vrot.lane.b32.xlu0 %v644, 96
        %v657 = vpop.permute.xlu0 %656
        %658 = vrot.lane.b32.xlu0 %v645, 96
        %v659 = vpop.permute.xlu0 %658
        %660 = vrot.lane.b32.xlu0 %v646, 96
        %v661 = vpop.permute.xlu0 %660
        %662 = vrot.lane.b32.xlu0 %v647, 96
        %v663 = vpop.permute.xlu0 %662
        %664 = vrot.lane.b32.xlu0 %v648, 96
        %v665 = vpop.permute.xlu0 %664
        %666 = vrot.lane.b32.xlu0 %v649, 96
        %v667 = vpop.permute.xlu0 %666
        %vm668 = vcmask 785408
        %v669 = vsel %vm668, %v657, %v659
        %v670 = vsel %vm668, %v659, %v661
        %v671 = vsel %vm668, %v663, %v665
        %v672 = vsel %vm668, %v665, %v667
        %v679 = vadd.f32 %v612, %v657
        %v680 = vadd.f32 %v613, %v669
        %v681 = vadd.f32 %v614, %v670
        %v682 = vadd.f32 %v615, %v663
        %v683 = vadd.f32 %v616, %v671
        %v684 = vadd.f32 %v617, %v672
        %s685 = scalar_lea.vmem [#allocation6], 224
        %v686 = vld [vmem:[%s685] sm:$0xff]
        %v687 = vld [vmem:[%s685 + $0x8] sm:$0xff]
        %v688 = vld [vmem:[%s685 + $0x10] sm:$0xff]
        %v689 = vld [vmem:[%s685 + $0x18] sm:$0xff]
        %694 = vrot.lane.b32.xlu0 %v686, 16
        %v695 = vpop.permute.xlu0 %694
        %696 = vrot.lane.b32.xlu0 %v687, 16
        %v697 = vpop.permute.xlu0 %696
        %698 = vrot.lane.b32.xlu0 %v688, 16
        %v699 = vpop.permute.xlu0 %698
        %700 = vrot.lane.b32.xlu0 %v689, 16
        %v701 = vpop.permute.xlu0 %700
        %vm702 = vcmask 130048
        %v703 = vsel %vm702, %v695, %v697
        %v704 = vsel %vm702, %v699, %v701
        %v711 = vmul.f32 %v545, %v695
        %v712 = vmul.f32 %v546, %v703
        %v713 = vmul.f32 %v547, %v697
        %v714 = vmul.f32 %v548, %v699
        %v715 = vmul.f32 %v549, %v704
        %v716 = vmul.f32 %v550, %v701
        %723 = vrot.lane.b32.xlu0 %v711, 95
        %v724 = vpop.permute.xlu0 %723
        %725 = vrot.lane.b32.xlu0 %v712, 95
        %v726 = vpop.permute.xlu0 %725
        %727 = vrot.lane.b32.xlu0 %v713, 95
        %v728 = vpop.permute.xlu0 %727
        %729 = vrot.lane.b32.xlu0 %v714, 95
        %v730 = vpop.permute.xlu0 %729
        %731 = vrot.lane.b32.xlu0 %v715, 95
        %v732 = vpop.permute.xlu0 %731
        %733 = vrot.lane.b32.xlu0 %v716, 95
        %v734 = vpop.permute.xlu0 %733
        %vm735 = vcmask 777216
        %v736 = vsel %vm735, %v724, %v726
        %v737 = vsel %vm735, %v726, %v728
        %v738 = vsel %vm735, %v730, %v732
        %v739 = vsel %vm735, %v732, %v734
        %v746 = vadd.f32 %v679, %v724
        %v747 = vadd.f32 %v680, %v736
        %v748 = vadd.f32 %v681, %v737
        %v749 = vadd.f32 %v682, %v730
        %v750 = vadd.f32 %v683, %v738
        %v751 = vadd.f32 %v684, %v739
        %s752 = scalar_lea.vmem [#allocation6], 256
        %v753 = vld [vmem:[%s752] sm:$0xff]
        %v754 = vld [vmem:[%s752 + $0x8] sm:$0xff]
        %v755 = vld [vmem:[%s752 + $0x10] sm:$0xff]
        %v756 = vld [vmem:[%s752 + $0x18] sm:$0xff]
        %761 = vrot.lane.b32.xlu0 %v753, 17
        %v762 = vpop.permute.xlu0 %761
        %763 = vrot.lane.b32.xlu0 %v754, 17
        %v764 = vpop.permute.xlu0 %763
        %765 = vrot.lane.b32.xlu0 %v755, 17
        %v766 = vpop.permute.xlu0 %765
        %767 = vrot.lane.b32.xlu0 %v756, 17
        %v768 = vpop.permute.xlu0 %767
        %vm769 = vcmask 138240
        %v770 = vsel %vm769, %v762, %v764
        %v771 = vsel %vm769, %v766, %v768
        %v778 = vmul.f32 %v545, %v762
        %v779 = vmul.f32 %v546, %v770
        %v780 = vmul.f32 %v547, %v764
        %v781 = vmul.f32 %v548, %v766
        %v782 = vmul.f32 %v549, %v771
        %v783 = vmul.f32 %v550, %v768
        %790 = vrot.lane.b32.xlu0 %v778, 94
        %v791 = vpop.permute.xlu0 %790
        %792 = vrot.lane.b32.xlu0 %v779, 94
        %v793 = vpop.permute.xlu0 %792
        %794 = vrot.lane.b32.xlu0 %v780, 94
        %v795 = vpop.permute.xlu0 %794
        %796 = vrot.lane.b32.xlu0 %v781, 94
        %v797 = vpop.permute.xlu0 %796
        %798 = vrot.lane.b32.xlu0 %v782, 94
        %v799 = vpop.permute.xlu0 %798
        %800 = vrot.lane.b32.xlu0 %v783, 94
        %v801 = vpop.permute.xlu0 %800
        %vm802 = vcmask 769024
        %v803 = vsel %vm802, %v791, %v793
        %v804 = vsel %vm802, %v793, %v795
        %v805 = vsel %vm802, %v797, %v799
        %v806 = vsel %vm802, %v799, %v801
        %v813 = vadd.f32 %v746, %v791
        %v814 = vadd.f32 %v747, %v803
        %v815 = vadd.f32 %v748, %v804
        %v816 = vadd.f32 %v749, %v797
        %v817 = vadd.f32 %v750, %v805
        %v818 = vadd.f32 %v751, %v806
        %v819 = vld [vmem:[%s2] sm:$0xff]
        %v820 = vld [vmem:[%s2 + $0x8] sm:$0xff]
        %822 = vset.pattern.permute.xlu0 0
        %823 = vperm.xlu0 %822, %v819
        %v824 = vpop.permute.xlu0 %823
        %827 = vset.pattern.permute.xlu0 0
        %828 = vperm.xlu0 %827, %v820
        %v829 = vpop.permute.xlu0 %828
        %v831 = vadd.f32 %v813, %v824
        %v832 = vadd.f32 %v814, %v824
        %v833 = vadd.f32 %v815, %v824
        %v834 = vadd.f32 %v816, %v829
        %v835 = vadd.f32 %v817, %v829
        %v836 = vadd.f32 %v818, %v829
        %v837 = vmax.f32 %v831, 0.0
        %v838 = vmax.f32 %v832, 0.0
        %v839 = vmax.f32 %v833, 0.0
        %v840 = vmax.f32 %v834, 0.0
        %v841 = vmax.f32 %v835, 0.0
        %v842 = vmax.f32 %v836, 0.0
        %v843 = vmin.f32 %v837, 6.0
        %v844 = vmin.f32 %v838, 6.0
        %v845 = vmin.f32 %v839, 6.0
        %v846 = vmin.f32 %v840, 6.0
        %v847 = vmin.f32 %v841, 6.0
        %v848 = vmin.f32 %v842, 6.0
        %v849 = vld [vmem:[%s3] sm:$0xff]
        %v850 = vld [vmem:[%s3 + $0x8] sm:$0xff]
        %v851 = vld [vmem:[%s4] sm:$0xff]
        %v852 = vld [vmem:[%s4 + $0x8] sm:$0xff]
        %854 = vset.pattern.permute.xlu0 0
        %855 = vperm.xlu0 %854, %v851
        %v856 = vpop.permute.xlu0 %855
        %859 = vset.pattern.permute.xlu0 0
        %860 = vperm.xlu0 %859, %v852
        %v861 = vpop.permute.xlu0 %860
        %869 = vrot.lane.b32.xlu0 %v843, 17
        %v870 = vpop.permute.xlu0 %869
        %871 = vrot.lane.b32.xlu0 %v844, 17
        %v872 = vpop.permute.xlu0 %871
        %873 = vrot.lane.b32.xlu0 %v845, 17
        %v874 = vpop.permute.xlu0 %873
        %875 = vrot.lane.b32.xlu0 %v846, 17
        %v876 = vpop.permute.xlu0 %875
        %877 = vrot.lane.b32.xlu0 %v847, 17
        %v878 = vpop.permute.xlu0 %877
        %879 = vrot.lane.b32.xlu0 %v848, 17
        %v880 = vpop.permute.xlu0 %879
        %v881 = vsel %vm769, %v870, %v872
        %v882 = vsel %vm769, %v872, %v874
        %v883 = vsel %vm769, %v876, %v878
        %v884 = vsel %vm769, %v878, %v880
        %v890 = vsel %vm702, %v849, 0
        %v893 = vsel %vm702, %v850, 0
        %895 = vmatpush.msra.mxu0 0.0
        %896 = vmatpush.msra.mxu0 0.0
        %897 = vmatpush.msra.mxu0 0.0
        %898 = vmatpush.msra.mxu0 0.0
        %899 = vmatpush.msra.mxu0 0.0
        %900 = vmatpush.msra.mxu0 0.0
        %901 = vmatpush.msra.mxu0 0.0
        %902 = vmatpush.msra.mxu0 0.0
        %903 = vmatpush.msra.mxu0 0.0
        %904 = vmatpush.msra.mxu0 0.0
        %905 = vmatpush.msra.mxu0 0.0
        %906 = vmatpush.msra.mxu0 0.0
        %907 = vmatpush.msra.mxu0 0.0
        %908 = vmatpush.msra.mxu0 0.0
        %909 = vmatpush.msra.mxu0 %v883
        %910 = vmatpush.msra.mxu0 %v881
        %911 = vmatmul.f32.gmra.mxu0 %v890
        %v912 = vpop.f32.mrf.mxu0
        %v913 = vadd.f32 %v856, %v912
        %914 = vmatmul.f32.gmra.mxu0 %v893
        %v915 = vpop.f32.mrf.mxu0
        %v916 = vadd.f32 %v861, %v915
        %917 = vdwg.mxu0
        %918 = vmatpush.msra.mxu0 0.0
        %919 = vmatpush.msra.mxu0 0.0
        %920 = vmatpush.msra.mxu0 0.0
        %921 = vmatpush.msra.mxu0 0.0
        %922 = vmatpush.msra.mxu0 0.0
        %923 = vmatpush.msra.mxu0 0.0
        %924 = vmatpush.msra.mxu0 0.0
        %925 = vmatpush.msra.mxu0 0.0
        %926 = vmatpush.msra.mxu0 0.0
        %927 = vmatpush.msra.mxu0 0.0
        %928 = vmatpush.msra.mxu0 0.0
        %929 = vmatpush.msra.mxu0 0.0
        %930 = vmatpush.msra.mxu0 0.0
        %931 = vmatpush.msra.mxu0 0.0
        %932 = vmatpush.msra.mxu0 %v884
        %933 = vmatpush.msra.mxu0 %v882
        %934 = vmatmul.f32.gmra.mxu0 %v890
        %v935 = vpop.f32.mrf.mxu0
        %v936 = vadd.f32 %v856, %v935
        %937 = vmatmul.f32.gmra.mxu0 %v893
        %v938 = vpop.f32.mrf.mxu0
        %v939 = vadd.f32 %v861, %v938
        %940 = vdwg.mxu0
        %v941 = vmax.f32 %v913, 0.0
        %v942 = vmax.f32 %v936, 0.0
        %v943 = vmax.f32 %v916, 0.0
        %v944 = vmax.f32 %v939, 0.0
        %v945 = vmin.f32 %v941, 6.0
        %v946 = vmin.f32 %v942, 6.0
        %v947 = vmin.f32 %v943, 6.0
        %v948 = vmin.f32 %v944, 6.0
        %949 = vst [vmem:[%s261] sm:$0xff] %v945
        %950 = vst [vmem:[%s261 + $0x8] sm:$0xff] %v946
        %951 = vst [vmem:[%s261 + $0x10] sm:$0xff] %v947
        %952 = vst [vmem:[%s261 + $0x18] sm:$0xff] %v948
        %s953 = sand.u32 %s141, 1
        %s954 = scalar_lea.sflag [#allocation5], %s953
        %s955 = sand.u32 %s141, 1
        %s956 = smul.addr %s955, 32
        %s957 = scalar_lea.vmem [#allocation8], %s956
        // Predicated region
        $region49: #{tpu_custom_call.1} parent=39 // pred_check
          %p958 = pneg %p151
        $region50: #{tpu_custom_call.1} parent=39 // pred_check_branch
          %960 = sbr.rel (%p958) target = $region52
        $region51: #{tpu_custom_call.1} parent=39 // pred_region
          %962 = vsyncadd %s954, 0
          %s963 = smul.addr %s23, 4
          %s964 = smul.addr %s963, 8
          %s965 = scalar_lea.hbm %s5, %s964
          %s966 = sshll.u32 %s957, 4
          %s967 = int_to_ptr.vmem [resolvable:$true] %s966
          %s968 = sshll.u32 %s965, 4
          %s969 = int_to_ptr.hbm [resolvable:$true] %s968
          %974 = dma.vmem_to_hbm [thread:$0]  %s967, 512, %s969, %s954, 256, 256, 16
        $region52: #{tpu_custom_call.1} parent=39 // pred_fallthru
          _
      $region40: #{tpu_custom_call.1} parent=5 // pred_fallthru
        _
      %p975 = scmp.le.s32.totalorder 2, %s18
      // Predicated region
      $region53: #{tpu_custom_call.1} parent=5 // pred_check
        %p976 = pneg %p975
      $region54: #{tpu_custom_call.1} parent=5 // pred_check_branch
        %978 = sbr.rel (%p976) target = $region56
      $region55: #{tpu_custom_call.1} parent=5 // pred_region
        %s979 = ssub.s32 %s18, 2
        // Predicated region
        $region57: #{tpu_custom_call.1} parent=55 // pred_check
          %p980 = pneg %p157
        $region58: #{tpu_custom_call.1} parent=55 // pred_check_branch
          %982 = sbr.rel (%p980) target = $region60
        $region59: #{tpu_custom_call.1} parent=55 // pred_region
          %s983 = sand.u32 %s142, 1
          %s984 = scalar_lea.sflag [#allocation5], %s983
          %s985 = sand.u32 %s142, 1
          %s986 = smul.addr %s985, 32
          %s987 = scalar_lea.vmem [#allocation8], %s986
          %989 = dma.done %s984, 512
        $region60: #{tpu_custom_call.1} parent=55 // pred_fallthru
          _
      $region56: #{tpu_custom_call.1} parent=5 // pred_fallthru
        _
    $region6: #{tpu_custom_call.1} parent=1 // loop_footer
      %s22 = sadd.s32 1, %s18
    $region7: #{tpu_custom_call.1} parent=1 // loop_footer_branch
      %17 = sbr.rel target = $region3
    $region8: #{tpu_custom_call.1} parent=1 // loop_exit
      _
    %990 = vsyncpa [#allocation4], 1
    %s991 = scalar_lea.sflag [#allocation4], 1
    %992 = vsyncpa %s991, 1
    %993 = vsyncpa [#allocation7], 1
    %994 = vsyncpa [#allocation5], 1
    %s995 = scalar_lea.sflag [#allocation5], 1
    %996 = vsyncpa %s995, 1

</llo_original>
